<compile_context>
chip_gen: v7x
topology: tpu7x:2x2x1
jax: 0.10.0
libtpu: 0.0.40
codegen_flags: <defaults>
</compile_context>

<pallas_src>
import functools

import jax
import jax.numpy as jnp
from jax import lax
from jax.experimental import pallas as pl
from jax.experimental.pallas import tpu as pltpu

EPS = 1e-5


# --------------------------------------------------------------------------- kernel
def basebf_kernel(x_ref, wt_ref, gb_ref, o_ref):
    # Linear (bias dropped: mean(z + b) = mean(z) + b, so it cancels exactly under
    # train-mode BatchNorm and leaves the variance unchanged).
    xb = x_ref[...].astype(jnp.bfloat16)                                 # (B, D_in)
    z = jnp.dot(xb, wt_ref[...], preferred_element_type=jnp.float32)     # (B, TN) f32

    # Stash z in the f32 output block so no separate (B, TN) scratch buffer is live.
    o_ref[...] = z
    z = o_ref[...]

    # Single-pass biased batch statistics over axis 0.
    inv_b = 1.0 / z.shape[0]
    s1 = jnp.sum(z, axis=0, keepdims=True)                               # (1, TN)
    s2 = jnp.sum(z * z, axis=0, keepdims=True)                           # (1, TN)
    mean = s1 * inv_b
    var = jnp.maximum(s2 * inv_b - mean * mean, 0.0)                     # clamp >= 0

    gamma = gb_ref[0:1, :]                                               # (1, TN)
    beta = gb_ref[1:2, :]                                                # (1, TN)

    # Fold normalization + affine into one per-feature scale/offset FMA.
    scale = gamma * lax.rsqrt(var + EPS)                                 # (1, TN)
    offset = beta - mean * scale                                         # (1, TN)

    # Normalize + affine + ReLU on the full (B, TN) tile: 1 FMA + 1 max.
    o_ref[...] = jnp.maximum(z * scale + offset, 0.0).astype(o_ref.dtype)


# --------------------------------------------------------------- tile / VMEM sizing
@functools.lru_cache(maxsize=1)
def _vmem_capacity_bytes():
    try:
        return int(pltpu.get_tpu_info().vmem_capacity_bytes)
    except Exception:  # pragma: no cover - conservative fallback (v7x-sized)
        return 64 * 1024 * 1024


def _pick_tile_n(batch, d_in, d_out_p, w_itemsize, budget):
    """Largest 128-multiple TN dividing d_out_p that fits the VMEM budget and keeps
    the feature grid at >= 2 steps (both v7x TensorCores busy) whenever possible."""
    for tn in (2048, 1024, 512, 256, 128):
        if d_out_p % tn != 0:
            continue
        if d_out_p >= 256 and d_out_p // tn < 2:
            continue  # guarantee >= 2 grid steps for megacore sharding
        footprint = (
            2 * d_in * tn * w_itemsize   # double-buffered weight tile (bf16)
            + 2 * batch * tn * 4         # double-buffered f32 output block
            + 2 * 2 * tn * 4             # double-buffered gamma/beta tile
            + 2 * batch * d_in * 4       # resident x (counted x2 for safety)
            + 2 * batch * tn * 4         # live in-kernel (B, TN) temporaries
        )
        if footprint <= budget:
            return tn
    return 128


# ------------------------------------------------------------------ param prep (once)
def prepare_basebf_params(weight, bias, gamma, beta, *, weight_dtype=jnp.bfloat16):
    """One-time parameter prep (NOT per forward call): transpose, pad the feature axis
    to a multiple of 128, cast the weight to bf16, and merge gamma/beta into a single
    (2, d_out_p) f32 slab (one DMA stream).  The Linear bias is dropped: it cancels
    exactly under train-mode BatchNorm."""
    del bias  # exact no-op for this forward (train-mode BN with batch statistics)
    d_out, d_in = weight.shape
    d_out_p = ((d_out + 127) // 128) * 128
    pad = d_out_p - d_out

    wt = jnp.asarray(weight).T                                   # (d_in, d_out)
    gamma = jnp.asarray(gamma, dtype=jnp.float32)
    beta = jnp.asarray(beta, dtype=jnp.float32)
    if pad:
        wt = jnp.pad(wt, ((0, 0), (0, pad)))                     # zero cols -> z = 0
        gamma = jnp.pad(gamma, (0, pad), constant_values=1.0)
        beta = jnp.pad(beta, (0, pad))
    gb = jnp.stack([gamma, beta], axis=0)                        # (2, d_out_p)
    return wt.astype(weight_dtype), gb, d_out


# ------------------------------------------------------------------------- forward
@functools.partial(jax.jit, static_argnames=("d_out",))
def basebf_forward(x, wt, gb, *, d_out):
    """x: (B, D_in) f32; wt: (D_in, D_out_p) bf16 (pre-transposed/padded/cast once);
    gb: (2, D_out_p) f32 [gamma; beta].  Returns (B, d_out) f32."""
    B, d_in = x.shape
    d_in_w, d_out_p = wt.shape
    assert d_in_w == d_in
    assert gb.shape == (2, d_out_p)
    assert d_out <= d_out_p

    cap = _vmem_capacity_bytes()
    budget = int(0.6 * cap)
    vmem_limit = min(max(int(0.75 * cap), 32 * 1024 * 1024), 100 * 1024 * 1024)

    tn = _pick_tile_n(B, d_in, d_out_p, jnp.dtype(wt.dtype).itemsize, budget)
    grid = (d_out_p // tn,)

    cost = pl.CostEstimate(
        flops=2 * B * d_in * d_out_p,
        transcendentals=0,
        bytes_accessed=(4 * B * d_in
                        + jnp.dtype(wt.dtype).itemsize * d_in * d_out_p
                        + 4 * 2 * d_out_p
                        + 4 * B * d_out),
    )

    return pl.pallas_call(
        basebf_kernel,
        # Unpadded output: only the final tile's store is clipped/masked -> no extra
        # post-kernel slice pass over the whole output in HBM.
        out_shape=jax.ShapeDtypeStruct((B, d_out), jnp.float32),
        grid=grid,
        in_specs=[
            pl.BlockSpec((B, d_in), lambda j: (0, 0)),    # full batch resident per tile
            pl.BlockSpec((d_in, tn), lambda j: (0, j)),   # streamed bf16 weight tile
            pl.BlockSpec((2, tn), lambda j: (0, j)),      # gamma/beta tile
        ],
        out_specs=pl.BlockSpec((B, tn), lambda j: (0, j)),
        compiler_params=pltpu.CompilerParams(
            dimension_semantics=("parallel",),            # shards across v7x's 2 TCs
            vmem_limit_bytes=vmem_limit,
        ),
        cost_estimate=cost,
    )(x, wt, gb)


# ------------------------------------------------------------------------ reference
def reference_forward(x, weight, bias, gamma, beta):
    z = jnp.dot(x, weight.T, precision=lax.Precision.HIGHEST) + bias
    mean = jnp.mean(z, axis=0, keepdims=True)
    var = jnp.mean((z - mean) ** 2, axis=0, keepdims=True)
    y = (z - mean) / jnp.sqrt(var + EPS) * gamma + beta
    return jnp.maximum(y, 0.0)


if __name__ == "__main__":
    key = jax.random.PRNGKey(0)
    B, D_IN, D_OUT = 8, 32, 300   # D_OUT=300 exercises padding (384) + clipped last store

    kx, kw, kb = jax.random.split(key, 3)
    x = jax.random.normal(kx, (B, D_IN), dtype=jnp.float32)

    # Deterministic parameter init mirroring nn.Linear's uniform(-1/sqrt(in), 1/sqrt(in))
    bound = 1.0 / jnp.sqrt(jnp.float32(D_IN))
    weight = jax.random.uniform(kw, (D_OUT, D_IN), minval=-bound, maxval=bound,
                                dtype=jnp.float32)
    bias = jax.random.uniform(kb, (D_OUT,), minval=-bound, maxval=bound,
                              dtype=jnp.float32)
    # BatchNorm1d default affine params
    gamma = jnp.ones((D_OUT,), dtype=jnp.float32)
    beta = jnp.zeros((D_OUT,), dtype=jnp.float32)

    # One-time parameter prep (transpose + pad + bf16 cast + gamma/beta slab).
    wt_p, gb, d_out = prepare_basebf_params(weight, bias, gamma, beta)

    out = basebf_forward(x, wt_p, gb, d_out=d_out)
    jax.block_until_ready(out)

    # Reference built from the SAME bf16-quantized weights / activations the kernel
    # consumes (verifies kernel math; the only difference vs the f32 PyTorch module is
    # the one-time bf16 weight cast, which is an intentional perf choice).
    w_used = wt_p[:, :D_OUT].astype(jnp.float32).T            # (D_OUT, D_IN)
    x_used = x.astype(jnp.bfloat16).astype(jnp.float32)
    ref = reference_forward(x_used, w_used, bias, gamma, beta)

    assert out.shape == (B, D_OUT)
    assert jnp.allclose(out, ref, atol=5e-4, rtol=5e-4), "mismatch vs reference"

    print("KERNEL_OK")
</pallas_src>

<mosaic_0001>
module attributes {stable_mosaic.version = 11 : i64} {
  func.func @basebf_kernel(%arg0: i32, %arg1: memref<8x32xf32, #tpu.memory_space<vmem>>, %arg2: memref<32x128xbf16, #tpu.memory_space<vmem>>, %arg3: memref<2x128xf32, #tpu.memory_space<vmem>>, %arg4: memref<8x128xf32, #tpu.memory_space<vmem>>) attributes {dimension_semantics = [#tpu.dimension_semantics<parallel>], iteration_bounds = array<i64: 3>, scalar_prefetch = 0 : i64, scratch_operands = 0 : i64, tpu.core_type = #tpu.core_type<tc>, window_params = [{pipeline_mode = #tpu.pipeline_mode<synchronous>, transform_indices = @transform_0, window_bounds = array<i64: 8, 32>}, {transform_indices = @transform_1, window_bounds = array<i64: 32, 128>}, {transform_indices = @transform_2, window_bounds = array<i64: 2, 128>}, {transform_indices = @transform_3, window_bounds = array<i64: 8, 128>}]} {
    %c0 = arith.constant 0 : index
    %c0_0 = arith.constant 0 : index
    %0 = vector.load %arg1[%c0, %c0_0] : memref<8x32xf32, #tpu.memory_space<vmem>>, vector<8x32xf32>
    %1 = arith.truncf %0 : vector<8x32xf32> to vector<8x32xbf16>
    %c0_1 = arith.constant 0 : index
    %c0_2 = arith.constant 0 : index
    %2 = vector.load %arg2[%c0_1, %c0_2] : memref<32x128xbf16, #tpu.memory_space<vmem>>, vector<32x128xbf16>
    %cst = arith.constant dense<0.000000e+00> : vector<8x128xf32>
    %3 = tpu.matmul %1, %2, %cst {dimension_numbers = #tpu.dot_dimension_numbers<[1], [0], [0], [1], [0, 0, 1, 1], [], []>} : vector<8x32xbf16>, vector<32x128xbf16>, vector<8x128xf32> -> vector<8x128xf32>
    %c0_3 = arith.constant 0 : index
    %c0_4 = arith.constant 0 : index
    %4 = vector.load %arg4[%c0_3, %c0_4] : memref<8x128xf32, #tpu.memory_space<vmem>>, vector<8x128xf32>
    tpu.vector_store %arg4[%c0_3, %c0_4], %3 {strides = array<i32>} : memref<8x128xf32, #tpu.memory_space<vmem>>, vector<8x128xf32>,
    %c0_5 = arith.constant 0 : index
    %c0_6 = arith.constant 0 : index
    %5 = vector.load %arg4[%c0_5, %c0_6] : memref<8x128xf32, #tpu.memory_space<vmem>>, vector<8x128xf32>
    %cst_7 = arith.constant dense<0.000000e+00> : vector<128xf32>
    %6 = vector.multi_reduction <add>, %5, %cst_7 [0] : vector<8x128xf32> to vector<128xf32>
    %7 = vector.shape_cast %6 : vector<128xf32> to vector<1x128xf32>
    %8 = arith.mulf %5, %5 : vector<8x128xf32>
    %cst_8 = arith.constant dense<0.000000e+00> : vector<128xf32>
    %9 = vector.multi_reduction <add>, %8, %cst_8 [0] : vector<8x128xf32> to vector<128xf32>
    %10 = vector.shape_cast %9 : vector<128xf32> to vector<1x128xf32>
    %cst_9 = arith.constant 1.250000e-01 : f32
    %11 = vector.broadcast %cst_9 : f32 to vector<1x128xf32>
    %12 = arith.mulf %7, %11 : vector<1x128xf32>
    %cst_10 = arith.constant 1.250000e-01 : f32
    %13 = vector.broadcast %cst_10 : f32 to vector<1x128xf32>
    %14 = arith.mulf %10, %13 : vector<1x128xf32>
    %15 = arith.mulf %12, %12 : vector<1x128xf32>
    %16 = arith.subf %14, %15 : vector<1x128xf32>
    %cst_11 = arith.constant 0.000000e+00 : f32
    %17 = vector.broadcast %cst_11 : f32 to vector<1x128xf32>
    %18 = arith.maximumf %16, %17 : vector<1x128xf32>
    %c0_12 = arith.constant 0 : index
    %c0_13 = arith.constant 0 : index
    %19 = vector.load %arg3[%c0_12, %c0_13] : memref<2x128xf32, #tpu.memory_space<vmem>>, vector<1x128xf32>
    %c1 = arith.constant 1 : index
    %c0_14 = arith.constant 0 : index
    %20 = vector.load %arg3[%c1, %c0_14] : memref<2x128xf32, #tpu.memory_space<vmem>>, vector<1x128xf32>
    %cst_15 = arith.constant 9.99999974E-6 : f32
    %21 = vector.broadcast %cst_15 : f32 to vector<1x128xf32>
    %22 = arith.addf %18, %21 : vector<1x128xf32>
    %23 = math.rsqrt %22 : vector<1x128xf32>
    %24 = arith.mulf %19, %23 : vector<1x128xf32>
    %25 = arith.mulf %12, %24 : vector<1x128xf32>
    %26 = arith.subf %20, %25 : vector<1x128xf32>
    %27 = vector.broadcast %24 : vector<1x128xf32> to vector<8x128xf32>
    %28 = arith.mulf %5, %27 : vector<8x128xf32>
    %29 = vector.broadcast %26 : vector<1x128xf32> to vector<8x128xf32>
    %30 = arith.addf %28, %29 : vector<8x128xf32>
    %cst_16 = arith.constant 0.000000e+00 : f32
    %31 = vector.broadcast %cst_16 : f32 to vector<8x128xf32>
    %32 = arith.maximumf %30, %31 : vector<8x128xf32>
    %c0_17 = arith.constant 0 : index
    %c0_18 = arith.constant 0 : index
    %33 = vector.load %arg4[%c0_17, %c0_18] : memref<8x128xf32, #tpu.memory_space<vmem>>, vector<8x128xf32>
    tpu.vector_store %arg4[%c0_17, %c0_18], %32 {strides = array<i32>} : memref<8x128xf32, #tpu.memory_space<vmem>>, vector<8x128xf32>,
    return
  }
  func.func @transform_0(%arg0: i32) -> (i32, i32) {
    %c0_i32 = arith.constant 0 : i32
    %c0_i32_0 = arith.constant 0 : i32
    %c0_i32_1 = arith.constant 0 : i32
    return %c0_i32, %c0_i32_0 : i32, i32
  }
  func.func @transform_1(%arg0: i32) -> (i32, i32) {
    %c0_i32 = arith.constant 0 : i32
    %c0_i32_0 = arith.constant 0 : i32
    return %c0_i32, %arg0 : i32, i32
  }
  func.func @transform_2(%arg0: i32) -> (i32, i32) {
    %c0_i32 = arith.constant 0 : i32
    %c0_i32_0 = arith.constant 0 : i32
    return %c0_i32, %arg0 : i32, i32
  }
  func.func @transform_3(%arg0: i32) -> (i32, i32) {
    %c0_i32 = arith.constant 0 : i32
    %c0_i32_0 = arith.constant 0 : i32
    return %c0_i32, %arg0 : i32, i32
  }
}

</mosaic_0001>

<llo_original>
// kernel: basebf_forward.1
$region0: #{basebf_forward.1}
  #allocation0 [shape = 'u32[]', space=smem, size = 0x4, offset = 0x4, fixed_abs, tag = 'smem constant byte address 0x4 - core index']
  #allocation1 [shape = 'u32[144,128]{1,0:T(1,128)}', space=vmem, size = 0x12000, scoped, tag = 'internal scratch']
  %s0 = inlined_call_operand.hbm [shape: f32[8,32], index: 0, kind: input, shape index: {}]
  %s1 = inlined_call_operand.hbm [shape: bf16[32,384], index: 1, kind: input, shape index: {}]
  %s2 = inlined_call_operand.vmem [shape: f32[2,384], index: 2, kind: input, shape index: {}]
  %s3 = inlined_call_operand.hbm [shape: f32[8,300], index: 3, kind: output, shape index: {}]
  %s4 = sld [smem:[#allocation0]]
  $region53: #{basebf_forward.1} parent=0
    _
  %s6 = ssub.s32 1, %s4
  %s7 = scalar_select 0, %s6, %s4
  $region1: #{basebf_forward.1} parent=0
    #allocation2 [shape = 'u8[4096]{0}', space=vmem, size = 0x1000, scoped, tag = 'input window, operand 0, single buffered']
    #allocation3 [shape = 's32[2]{0}', space=sflag, size = 0x8, scoped, tag = 'scoped memory for basebf_forward.1']
    #allocation4 [shape = 's32[2]{0}', space=sflag, size = 0x8, scoped, tag = 'scoped memory for basebf_forward.1']
    #allocation5 [shape = 'u8[16384]{0}', space=vmem, size = 0x4000, scoped, tag = 'input window, operand 1']
    #allocation6 [shape = 's32[2]{0}', space=sflag, size = 0x8, scoped, tag = 'scoped memory for basebf_forward.1']
    #allocation7 [shape = 'u8[8192]{0}', space=vmem, size = 0x2000, scoped, tag = 'output window, operand 0']
    %8 = vsyncpa [#allocation3], 0
    %9 = vsyncpa [#allocation6], 0
    %s10 = scalar_lea.sflag [#allocation6], 1
    %11 = vsyncpa %s10, 0
    %12 = vsyncpa [#allocation4], 0
    %s13 = scalar_lea.sflag [#allocation4], 1
    %14 = vsyncpa %s13, 0
    loop: start=0, step=1, limit=5
    $region2: #{basebf_forward.1} parent=1 // loop_pre_header
      _
    $region3: #{basebf_forward.1} parent=1 // loop_header
      %s16 = sphi 0, %s20
      %p17 = scmp.ge.s32.totalorder %s16, 5
      %s24 = sphi 0, %s24
      %s26 = sphi 0, %s24
      %s27 = sphi 0, %s26
      %s41 = sphi 0, %s27
      %s47 = sphi 0, %s49
      %s50 = sphi 0, %s47
      %s51 = sphi 0, %s50
      %s67 = sphi 0, %s51
      %s73 = sphi 0, %s75
      %s76 = sphi 0, %s73
      %s77 = sphi 0, %s76
      %s93 = sphi 0, %s77
      %s99 = sphi 0, %s101
      %s102 = sphi 0, %s99
      %s103 = sphi 0, %s102
      %s119 = sphi 0, %s103
    $region4: #{basebf_forward.1} parent=1 // loop_header_branch
      %19 = sbr.rel (%p17) target = $region8
    $region5: #{basebf_forward.1} parent=1 // loop_body
      %s21 = ssub.s32 %s16, 1
      %s22 = ssub.s32 %s16, 2
      %s23 = sadd.s32 %s16, 1
      %s25 = sadd.s32 %s24, 1
      %p28 = scmp.eq.s32.totalorder %s16, 2
      %p29 = scmp.ne.s32.totalorder %s24, %s26
      %p30 = scmp.eq.s32.totalorder %s16, 0
      %p31 = por %p29, %p30
      %p32 = scmp.ne.s32.totalorder %s24, %s26
      %p33 = scmp.eq.s32.totalorder %s21, 2
      %p34 = por %p32, %p33
      %p35 = scmp.ne.s32.totalorder %s26, %s27
      %p36 = scmp.eq.s32.totalorder %s21, 0
      %p37 = por %p35, %p36
      %p38 = scmp.ne.s32.totalorder %s26, %s27
      %p39 = scmp.eq.s32.totalorder %s22, 2
      %p40 = por %p38, %p39
      %p42 = scmp.ne.s32.totalorder %s27, %s41
      %p43 = scmp.eq.s32.totalorder %s22, 0
      %p44 = por %p42, %p43
      %s45 = ssub.s32 %s16, %s23
      %p46 = scmp.eq.s32.totalorder %s45, 0
      %s48 = sadd.s32 %s47, 1
      %s49 = scalar_select %p46, %s47, %s48
      %p52 = pneg %p46
      %p53 = scmp.eq.s32.totalorder %s16, 2
      %p54 = por %p52, %p53
      %p55 = scmp.ne.s32.totalorder %s47, %s50
      %p56 = scmp.eq.s32.totalorder %s16, 0
      %p57 = por %p55, %p56
      %p58 = scmp.ne.s32.totalorder %s47, %s50
      %p59 = scmp.eq.s32.totalorder %s21, 2
      %p60 = por %p58, %p59
      %p61 = scmp.ne.s32.totalorder %s50, %s51
      %p62 = scmp.eq.s32.totalorder %s21, 0
      %p63 = por %p61, %p62
      %p64 = scmp.ne.s32.totalorder %s50, %s51
      %p65 = scmp.eq.s32.totalorder %s22, 2
      %p66 = por %p64, %p65
      %p68 = scmp.ne.s32.totalorder %s51, %s67
      %p69 = scmp.eq.s32.totalorder %s22, 0
      %p70 = por %p68, %p69
      %s71 = ssub.s32 %s16, %s23
      %p72 = scmp.eq.s32.totalorder %s71, 0
      %s74 = sadd.s32 %s73, 1
      %s75 = scalar_select %p72, %s73, %s74
      %p78 = pneg %p72
      %p79 = scmp.eq.s32.totalorder %s16, 2
      %p80 = por %p78, %p79
      %p81 = scmp.ne.s32.totalorder %s73, %s76
      %p82 = scmp.eq.s32.totalorder %s16, 0
      %p83 = por %p81, %p82
      %p84 = scmp.ne.s32.totalorder %s73, %s76
      %p85 = scmp.eq.s32.totalorder %s21, 2
      %p86 = por %p84, %p85
      %p87 = scmp.ne.s32.totalorder %s76, %s77
      %p88 = scmp.eq.s32.totalorder %s21, 0
      %p89 = por %p87, %p88
      %p90 = scmp.ne.s32.totalorder %s76, %s77
      %p91 = scmp.eq.s32.totalorder %s22, 2
      %p92 = por %p90, %p91
      %p94 = scmp.ne.s32.totalorder %s77, %s93
      %p95 = scmp.eq.s32.totalorder %s22, 0
      %p96 = por %p94, %p95
      %s97 = ssub.s32 %s16, %s23
      %p98 = scmp.eq.s32.totalorder %s97, 0
      %s100 = sadd.s32 %s99, 1
      %s101 = scalar_select %p98, %s99, %s100
      %p104 = pneg %p98
      %p105 = scmp.eq.s32.totalorder %s16, 2
      %p106 = por %p104, %p105
      %p107 = scmp.ne.s32.totalorder %s99, %s102
      %p108 = scmp.eq.s32.totalorder %s16, 0
      %p109 = por %p107, %p108
      %p110 = scmp.ne.s32.totalorder %s99, %s102
      %p111 = scmp.eq.s32.totalorder %s21, 2
      %p112 = por %p110, %p111
      %p113 = scmp.ne.s32.totalorder %s102, %s103
      %p114 = scmp.eq.s32.totalorder %s21, 0
      %p115 = por %p113, %p114
      %p116 = scmp.ne.s32.totalorder %s102, %s103
      %p117 = scmp.eq.s32.totalorder %s22, 2
      %p118 = por %p116, %p117
      %p120 = scmp.ne.s32.totalorder %s103, %s119
      %p121 = scmp.eq.s32.totalorder %s22, 0
      %p122 = por %p120, %p121
      %p123 = scmp.le.s32.totalorder 1, %s16
      %p124 = scmp.lt.s32.totalorder %s16, 4
      %p125 = pnand %p123, %p124
      %p126 = pneg %p125
      // Predicated region
      $region9: #{basebf_forward.1} parent=5 // pred_check
        _
      $region10: #{basebf_forward.1} parent=5 // pred_check_branch
        %128 = sbr.rel (%p125) target = $region12
      $region11: #{basebf_forward.1} parent=5 // pred_region
        %s129 = ssub.s32 %s16, 1
        // Predicated region
        $region13: #{basebf_forward.1} parent=11 // pred_check
          %p130 = pneg %p37
        $region14: #{basebf_forward.1} parent=11 // pred_check_branch
          %132 = sbr.rel (%p130) target = $region16
        $region15: #{basebf_forward.1} parent=11 // pred_region
          %s134 = ssub.s32 128, 128
          %135 = vsyncadd [#allocation3], %s134
          %s137 = sshll.u32 [#allocation2], 4
          %s138 = int_to_ptr.vmem [resolvable:$true] %s137
          %140 = dma.hbm_to_vmem [thread:$0]  %s0, 128, %s138, [#allocation3]
        $region16: #{basebf_forward.1} parent=11 // pred_fallthru
          _
      $region12: #{basebf_forward.1} parent=5 // pred_fallthru
        _
      %p141 = scmp.lt.s32.totalorder %s16, 3
      // Predicated region
      $region17: #{basebf_forward.1} parent=5 // pred_check
        %p142 = pneg %p141
      $region18: #{basebf_forward.1} parent=5 // pred_check_branch
        %144 = sbr.rel (%p142) target = $region20
      $region19: #{basebf_forward.1} parent=5 // pred_region
        // Predicated region
        $region21: #{basebf_forward.1} parent=19 // pred_check
          %p145 = pneg %p57
        $region22: #{basebf_forward.1} parent=19 // pred_check_branch
          %147 = sbr.rel (%p145) target = $region24
        $region23: #{basebf_forward.1} parent=19 // pred_region
          %s148 = sand.u32 %s47, 1
          %s149 = scalar_lea.sflag [#allocation6], %s148
          %s150 = sand.u32 %s47, 1
          %s151 = smul.addr %s150, 16
          %s152 = scalar_lea.vmem [#allocation5], %s151
          %s154 = ssub.s32 256, 256
          %155 = vsyncadd %s149, %s154
          %s156 = smul.addr %s16, 64
          %s157 = scalar_lea.hbm %s1, %s156
          %s158 = sshll.u32 %s152, 4
          %s159 = int_to_ptr.vmem [resolvable:$true] %s158
          %164 = dma.hbm_to_vmem [thread:$0]  %s157, 256, %s159, %s149, 192, 64, 4
        $region24: #{basebf_forward.1} parent=19 // pred_fallthru
          _
        // Predicated region
        $region25: #{basebf_forward.1} parent=19 // pred_check
          %p165 = pneg %p83
        $region26: #{basebf_forward.1} parent=19 // pred_check_branch
          %167 = sbr.rel (%p165) target = $region28
        $region27: #{basebf_forward.1} parent=19 // pred_region
          %p168 = scmp.lt.s32.totalorder %s16, 2
          %s169 = scalar_select %p168, %s16, 2
          %s170 = smul.addr %s169, 2
          %s171 = scalar_lea.vmem %s2, %s170
        $region28: #{basebf_forward.1} parent=19 // pred_fallthru
          _
      $region20: #{basebf_forward.1} parent=5 // pred_fallthru
        _
      %p172 = scmp.le.s32.totalorder 1, %s16
      %p173 = scmp.lt.s32.totalorder %s16, 4
      %p174 = pnand %p172, %p173
      %p175 = pneg %p174
      // Predicated region
      $region29: #{basebf_forward.1} parent=5 // pred_check
        _
      $region30: #{basebf_forward.1} parent=5 // pred_check_branch
        %177 = sbr.rel (%p174) target = $region32
      $region31: #{basebf_forward.1} parent=5 // pred_region
        %s178 = ssub.s32 %s16, 1
        // Predicated region
        $region33: #{basebf_forward.1} parent=31 // pred_check
          %p179 = pneg %p37
        $region34: #{basebf_forward.1} parent=31 // pred_check_branch
          %181 = sbr.rel (%p179) target = $region36
        $region35: #{basebf_forward.1} parent=31 // pred_region
          %182 = dma.done [#allocation3], 128
        $region36: #{basebf_forward.1} parent=31 // pred_fallthru
          _
        %s183 = sand.u32 %s50, 1
        %s184 = scalar_lea.sflag [#allocation6], %s183
        %s185 = sand.u32 %s50, 1
        %s186 = smul.addr %s185, 16
        %s187 = scalar_lea.vmem [#allocation5], %s186
        // Predicated region
        $region37: #{basebf_forward.1} parent=31 // pred_check
          %p188 = pneg %p63
        $region38: #{basebf_forward.1} parent=31 // pred_check_branch
          %190 = sbr.rel (%p188) target = $region40
        $region39: #{basebf_forward.1} parent=31 // pred_region
          %191 = dma.done %s184, 256
        $region40: #{basebf_forward.1} parent=31 // pred_fallthru
          _
        %p192 = pneg %p37
        %p193 = pneg %p34
        %s194 = sand.u32 %s50, 1
        %s195 = scalar_lea.sflag [#allocation6], %s194
        %s196 = sand.u32 %s50, 1
        %s197 = smul.addr %s196, 16
        %s198 = scalar_lea.vmem [#allocation5], %s197
        %p199 = pneg %p63
        %p200 = pneg %p60
        %p201 = scmp.lt.s32.totalorder %s21, 2
        %s202 = scalar_select %p201, %s21, 2
        %s203 = smul.addr %s202, 2
        %s204 = scalar_lea.vmem %s2, %s203
        %p205 = pneg %p89
        %p206 = pneg %p86
        %p207 = pneg %p115
        %p208 = pneg %p112
        %s209 = sand.u32 %s102, 1
        %s210 = scalar_lea.sflag [#allocation4], %s209
        %s211 = sand.u32 %s102, 1
        %s212 = smul.addr %s211, 8
        %s213 = scalar_lea.vmem [#allocation7], %s212
        %p214 = scmp.lt.s32.totalorder %s21, 2
        %s215 = scalar_select %p214, %s21, 2
        %s216 = smul.addr %s215, 2
        %s217 = scalar_lea.vmem %s2, %s216
        %v219 = vld [vmem:[#allocation2] sm:$0xff]
        %v220 = vpack.c.bf16 %v219, %v219
        %v221 = vld [vmem:[%s187] sm:$0xf]
        %v222 = vld [vmem:[%s187 + $0x4] sm:$0xf]
        %v223 = vld [vmem:[%s187 + $0x8] sm:$0xf]
        %v224 = vld [vmem:[%s187 + $0xc] sm:$0xf]
        %v229 = vunpack.c.l.b16 %v221
        %v230 = vunpack.c.l.b16 %v222
        %v231 = vunpack.c.l.b16 %v223
        %v232 = vunpack.c.l.b16 %v224
        %v233 = vpack.c.b16 %v230, %v229
        %v234 = vpack.c.b16 %v232, %v231
        %vm237 = vcmask 261120
        %v239 = vsel %vm237, %v220, 0
        %241 = vmatprep.subr.bf16.mxu0 0
        %242 = vmatpush1.bf16.msra.mxu0 %v233
        %243 = vmatprep.subr.bf16.mxu0 0
        %244 = vmatpush1.bf16.msra.mxu0 %v234
        %245 = vmatprep.subr.bf16.mxu0 0
        %246 = vmatpush1.bf16.msra.mxu0 0
        %247 = vmatprep.subr.bf16.mxu0 0
        %248 = vmatpush1.bf16.msra.mxu0 0
        %249 = vmatprep.subr.bf16.mxu0 0
        %250 = vmatpush1.bf16.msra.mxu0 0
        %251 = vmatprep.subr.bf16.mxu0 0
        %252 = vmatpush1.bf16.msra.mxu0 0
        %253 = vmatprep.subr.bf16.mxu0 0
        %254 = vmatpush1.bf16.msra.mxu0 0
        %255 = vmatprep.subr.bf16.mxu0 0
        %256 = vmatpush1.bf16.msra.mxu0 0
        %257 = vmatprep.subr.bf16.mxu0 0
        %258 = vmatpush1.bf16.msra.mxu0 0
        %259 = vmatprep.subr.bf16.mxu0 0
        %260 = vmatpush1.bf16.msra.mxu0 0
        %261 = vmatprep.subr.bf16.mxu0 0
        %262 = vmatpush1.bf16.msra.mxu0 0
        %263 = vmatprep.subr.bf16.mxu0 0
        %264 = vmatpush1.bf16.msra.mxu0 0
        %265 = vmatprep.subr.bf16.mxu0 0
        %266 = vmatpush1.bf16.msra.mxu0 0
        %267 = vmatprep.subr.bf16.mxu0 0
        %268 = vmatpush1.bf16.msra.mxu0 0
        %269 = vmatprep.subr.bf16.mxu0 0
        %270 = vmatpush1.bf16.msra.mxu0 0
        %271 = vmatprep.subr.bf16.mxu0 0
        %272 = vmatpush1.bf16.msra.mxu0 0
        %273 = vmatprep.mubr.bf16.mxu0 0
        %274 = vmatmul.mubr.bf16.gmra.mrb[0].mxu0 %v239
        %v275 = vpop.f32.mrb[0].mxu0
        %v276 = vadd.f32 0.0, %v275
        %v277 = vpop.f32.mrb[0].mxu0
        %v278 = vpop.f32.mrb[0].mxu0
        %v279 = vpop.f32.mrb[0].mxu0
        %280 = vdwg.mxu0
        %281 = vst [vmem:[%s213] sm:$0xff] %v276
        %v282 = vld [vmem:[%s213] sm:$0xff]
        %v283 = vrot.slane %v282, 4
        %v284 = vadd.f32 %v282, %v283
        %v285 = vrot.slane %v284, 2
        %v286 = vadd.f32 %v284, %v285
        %v287 = vrot.slane %v286, 1
        %v288 = vadd.f32 %v286, %v287
        %v289 = vmul.f32 %v282, %v282
        %v290 = vrot.slane %v289, 4
        %v291 = vadd.f32 %v289, %v290
        %v292 = vrot.slane %v291, 2
        %v293 = vadd.f32 %v291, %v292
        %v294 = vrot.slane %v293, 1
        %v295 = vadd.f32 %v293, %v294
        %v296 = vmul.f32 %v288, 0.125
        %v297 = vmul.f32 %v295, 0.125
        %v298 = vmul.f32 %v296, %v296
        %v299 = vsub.f32 %v297, %v298
        %v300 = vmax.f32 %v299, 0.0
        %v301 = vld [vmem:[%s217] sm:$0x1]
        %v302 = vld [vmem:[%s217 + $0x1] sm:$0x1]
        %v303 = vadd.f32 %v300, 1e-05
        %v304 = vrsqrt.pop %v303
        %v305 = vmul.f32 %v301, %v304
        %v306 = vmul.f32 %v296, %v305
        %v307 = vsub.f32 %v302, %v306
        %v308 = vlaneseq
        %v309 = vshrl.u32 %v308, 7
        %v310 = vsub.s32 0, %v309
        %v311 = vrot.slane %v305, %v310
        %v312 = vmul.f32 %v282, %v311
        %v313 = vlaneseq
        %v314 = vshrl.u32 %v313, 7
        %v315 = vsub.s32 0, %v314
        %v316 = vrot.slane %v307, %v315
        %v317 = vadd.f32 %v312, %v316
        %v318 = vmax.f32 %v317, 0.0
        %319 = vst [vmem:[%s213] sm:$0xff] %v318
        %s320 = sand.u32 %s102, 1
        %s321 = scalar_lea.sflag [#allocation4], %s320
        %s322 = sand.u32 %s102, 1
        %s323 = smul.addr %s322, 8
        %s324 = scalar_lea.vmem [#allocation7], %s323
        // Predicated region
        $region41: #{basebf_forward.1} parent=31 // pred_check
          %p325 = pneg %p112
        $region42: #{basebf_forward.1} parent=31 // pred_check_branch
          %327 = sbr.rel (%p325) target = $region44
        $region43: #{basebf_forward.1} parent=31 // pred_region
          %s329 = ssub.s32 128, 128
          %330 = vsyncadd %s321, %s329
          %s331 = smul.addr %s21, 128
          %s332 = scalar_lea.hbm %s3, %s331
          %s334 = sshll.u32 %s324, 4
          %s335 = int_to_ptr.vmem [resolvable:$true] %s334
          %337 = dma.vmem_to_hbm [thread:$0]  %s335, 128, %s332, %s321
        $region44: #{basebf_forward.1} parent=31 // pred_fallthru
          _
      $region32: #{basebf_forward.1} parent=5 // pred_fallthru
        _
      %p338 = scmp.le.s32.totalorder 2, %s16
      // Predicated region
      $region45: #{basebf_forward.1} parent=5 // pred_check
        %p339 = pneg %p338
      $region46: #{basebf_forward.1} parent=5 // pred_check_branch
        %341 = sbr.rel (%p339) target = $region48
      $region47: #{basebf_forward.1} parent=5 // pred_region
        %s342 = ssub.s32 %s16, 2
        // Predicated region
        $region49: #{basebf_forward.1} parent=47 // pred_check
          %p343 = pneg %p118
        $region50: #{basebf_forward.1} parent=47 // pred_check_branch
          %345 = sbr.rel (%p343) target = $region52
        $region51: #{basebf_forward.1} parent=47 // pred_region
          %s346 = sand.u32 %s103, 1
          %s347 = scalar_lea.sflag [#allocation4], %s346
          %s348 = sand.u32 %s103, 1
          %s349 = smul.addr %s348, 8
          %s350 = scalar_lea.vmem [#allocation7], %s349
          %351 = dma.done %s347, 128
        $region52: #{basebf_forward.1} parent=47 // pred_fallthru
          _
      $region48: #{basebf_forward.1} parent=5 // pred_fallthru
        _
    $region6: #{basebf_forward.1} parent=1 // loop_footer
      %s20 = sadd.s32 1, %s16
    $region7: #{basebf_forward.1} parent=1 // loop_footer_branch
      %15 = sbr.rel target = $region3
    $region8: #{basebf_forward.1} parent=1 // loop_exit
      _
    %352 = vsyncpa [#allocation3], 1
    %s353 = scalar_lea.sflag [#allocation3], 1
    %354 = vsyncpa %s353, 1
    %355 = vsyncpa [#allocation6], 1
    %s356 = scalar_lea.sflag [#allocation6], 1
    %357 = vsyncpa %s356, 1
    %358 = vsyncpa [#allocation4], 1
    %s359 = scalar_lea.sflag [#allocation4], 1
    %360 = vsyncpa %s359, 1

</llo_original>
